<compile_context>
chip_gen: v7x
topology: tpu7x:2x2x1
jax: 0.10.0
libtpu: 0.0.40
codegen_flags: <defaults>
</compile_context>

<pallas_src>
import functools

import numpy as np
import jax
import jax.numpy as jnp
from jax.experimental import pallas as pl
from jax.experimental.pallas import tpu as pltpu


# --------------------------------------------------------------------------
# Pallas kernel (single step, everything resident in VMEM):
#   y     = y_noisy / std(y_noisy, ddof=1)          (VPU + EUP rsqrt)
#   resid = (I - X (X^T X)^-1 X^T) y                (one MXU matmul, (O*F,F)x(F,Lp))
#   err   = S @ resid^2   with S block-averaging    (one MXU matmul, (O,O*F)x(O*F,Lp))
#   out   = exp(-err)*scale + bias                  (EUP + fused multiply-add)
# --------------------------------------------------------------------------
def _srn_kernel(y_ref, r_ref, s_ref, out_ref, *, exponent, normalize):
    F = y_ref.shape[0]
    y = y_ref[...]                                   # (F, Lp); noise already added
    if normalize:
        # torch.std over the patch-feature dim (unbiased, ddof=1); the module
        # divides y by the std but does NOT mean-center it.
        mu = jnp.mean(y, axis=0, keepdims=True)
        var = jnp.sum((y - mu) ** 2, axis=0, keepdims=True) * (1.0 / (F - 1))
        # tiny eps keeps the zero-padded lanes finite; negligible (1e-30) for real data
        y = y * jax.lax.rsqrt(var + 1e-30)

    # residual = (I - X (X^T X)^-1 X^T) y for all output channels in one matmul
    resid = jnp.dot(r_ref[...], y, preferred_element_type=jnp.float32)       # (O*F, Lp)
    # err[o, l] = mean_f resid[o, f, l]^2  via block-averaging matmul (no reshape)
    err = jnp.dot(s_ref[...], resid * resid, preferred_element_type=jnp.float32)  # (O, Lp)

    if exponent:
        scale = 1.0 / (1.0 - np.exp(-1.0))
        bias = -np.exp(-1.0) * scale - 0.5
        out = jnp.exp(-err) * scale + bias
    elif normalize:
        out = 1.0 - err
    else:
        out = -err
    out_ref[...] = out.astype(out_ref.dtype)


def srn_pallas(y_fl, r_flat, s_avg, *, exponent=True, normalize=True):
    F, Lp = y_fl.shape
    O = s_avg.shape[0]
    kernel = functools.partial(_srn_kernel, exponent=exponent, normalize=normalize)
    # No grid: total data is ~120 KB, far under VMEM on v5e/v6e/v7x, so a single
    # step avoids per-grid-step overhead and keeps the output lane-dense.
    return pl.pallas_call(
        kernel,
        out_shape=jax.ShapeDtypeStruct((O, Lp), jnp.float32),
        in_specs=[
            pl.BlockSpec(memory_space=pltpu.MemorySpace.VMEM),   # y, (F, Lp)
            pl.BlockSpec(memory_space=pltpu.MemorySpace.VMEM),   # R, (O*F, F)
            pl.BlockSpec(memory_space=pltpu.MemorySpace.VMEM),   # S, (O, O*F)
        ],
        out_specs=pl.BlockSpec(memory_space=pltpu.MemorySpace.VMEM),
    )(y_fl, r_flat, s_avg)


# --------------------------------------------------------------------------
# Plain-JAX glue (nn.Unfold patch extraction, tiny DxD inverse, projector)
# --------------------------------------------------------------------------
def unfold_nchw(x, k, padding):
    """Exactly nn.Unfold((k, k), padding) on an NCHW tensor -> (B, C*k*k, L)."""
    B, C, H, W = x.shape
    xp = jnp.pad(x, ((0, 0), (0, 0), (padding, padding), (padding, padding)))
    Ho = H + 2 * padding - k + 1
    Wo = W + 2 * padding - k + 1
    patches = []
    for ki in range(k):
        for kj in range(k):
            patches.append(xp[:, :, ki:ki + Ho, kj:kj + Wo])
    y = jnp.stack(patches, axis=2)                 # (B, C, k*k, Ho, Wo)
    y = y.reshape(B, C * k * k, Ho * Wo)           # channel-major, same as Unfold
    return y, Ho, Wo


def build_residual_and_avg(weights, degree, num_slices):
    """Precompute R = I - X (X^T X)^-1 X^T (flattened) and the block-mean matrix."""
    O, C, kh, kw, S = weights.shape
    F = C * kh * kw
    base = weights.reshape(O, F, S)
    cols = [base] + [base ** (i + 2) for i in range(degree - 1)]  # cols 0:S stay the originals
    X = jnp.concatenate(cols, axis=2)
    X = jnp.concatenate([jnp.ones((O, F, 1), X.dtype), X], axis=2)   # (O, F, D)
    X_cov = jnp.einsum('ofd,ofe->ode', X, X)                          # X^T X, (O, D, D)
    # TODO(synk): torch.linalg.inv has no Pallas equivalent; the tiny DxD inverse stays in plain JAX.
    X_cov_inv = jnp.linalg.inv(X_cov)
    M = jnp.einsum('ode,ofe->odf', X_cov_inv, X)                      # (O, D, F)
    P = jnp.einsum('ofd,odg->ofg', X, M)                              # (O, F, F) hat matrix
    R = jnp.eye(F, dtype=P.dtype)[None, :, :] - P                     # residual projector
    r_flat = R.reshape(O * F, F)
    s_avg = jnp.kron(jnp.eye(O, dtype=P.dtype),
                     jnp.full((1, F), 1.0 / F, P.dtype))              # (O, O*F)
    return r_flat, s_avg


def srn_layer_forward(x, weights, noise_key, *, kernel_size, padding, epsilon,
                      degree, num_slices, exponent=True, normalize=True):
    B = x.shape[0]
    O = weights.shape[0]
    y, Ho, Wo = unfold_nchw(x, kernel_size, padding)                  # (B, F, L)
    F, L = y.shape[1], y.shape[2]
    noise = jax.random.normal(noise_key, y.shape, dtype=y.dtype)      # torch.randn_like
    y = y + epsilon * noise                                           # fused outside the kernel
    # Fold batch onto the lane axis and pad to a lane-dense multiple of 128.
    y_fl = jnp.transpose(y, (1, 0, 2)).reshape(F, B * L)
    Lp = ((B * L + 127) // 128) * 128
    y_fl = jnp.pad(y_fl, ((0, 0), (0, Lp - B * L)))
    r_flat, s_avg = build_residual_and_avg(weights, degree, num_slices)
    out = srn_pallas(y_fl, r_flat, s_avg,
                     exponent=exponent, normalize=normalize)          # (O, Lp)
    out = out[:, :B * L].reshape(O, B, L)
    return jnp.transpose(out, (1, 0, 2)).reshape(B, O, Ho, Wo)


def srn_layer_reference(x, weights, noise_key, *, kernel_size, padding, epsilon,
                        degree, num_slices):
    """Pure-JAX mirror of the PyTorch forward (exponent=True, normalize=True)."""
    y, Ho, Wo = unfold_nchw(x, kernel_size, padding)
    noise = jax.random.normal(noise_key, y.shape, dtype=y.dtype)
    y = y + epsilon * noise
    F = y.shape[1]
    mu = jnp.mean(y, axis=1, keepdims=True)
    std = jnp.sqrt(jnp.sum((y - mu) ** 2, axis=1, keepdims=True) / (F - 1))
    y = y / std
    O, C, kh, kw, S = weights.shape
    base = weights.reshape(O, C * kh * kw, S)
    cols = [base] + [base ** (i + 2) for i in range(degree - 1)]
    X = jnp.concatenate(cols, axis=2)
    X = jnp.concatenate([jnp.ones((O, X.shape[1], 1), X.dtype), X], axis=2)
    X_cov = jnp.einsum('ofd,ofe->ode', X, X)
    X_cov_inv = jnp.linalg.inv(X_cov)
    M = jnp.einsum('ode,ofe->odf', X_cov_inv, X)
    W = jnp.einsum('odf,bfl->bodl', M, y)
    pred = jnp.einsum('ofd,bodl->bofl', X, W)
    err = jnp.mean((y[:, None] - pred) ** 2, axis=2)
    A = (jnp.exp(-err) - np.exp(-1.0)) / (1.0 - np.exp(-1.0))
    return (A - 0.5).reshape(x.shape[0], O, Ho, Wo)


if __name__ == "__main__":
    # Small shapes consistent with the module's forward.
    B, C_in, H, W = 2, 4, 16, 16
    C_out, K, S, DEG = 6, 3, 2, 4
    PAD, EPS = 0, 1e-4

    key = jax.random.PRNGKey(0)
    k_x, k_w, k_n = jax.random.split(key, 3)

    x = jax.random.normal(k_x, (B, C_in, H, W), dtype=jnp.float32)

    # Deterministic kaiming_uniform_-style init for weights (O, C, k, k, S):
    # fan_in = C*k*k*S, gain = sqrt(2), bound = gain*sqrt(3/fan_in)
    fan_in = C_in * K * K * S
    bound = float(np.sqrt(2.0) * np.sqrt(3.0 / fan_in))
    weights = jax.random.uniform(k_w, (C_out, C_in, K, K, S),
                                 minval=-bound, maxval=bound, dtype=jnp.float32)

    out = srn_layer_forward(x, weights, k_n, kernel_size=K, padding=PAD,
                            epsilon=EPS, degree=DEG, num_slices=S)
    out = jax.block_until_ready(out)

    ref = jax.block_until_ready(
        srn_layer_reference(x, weights, k_n, kernel_size=K, padding=PAD,
                            epsilon=EPS, degree=DEG, num_slices=S))

    assert out.shape == (B, C_out, H - K + 1, W - K + 1), out.shape
    assert bool(jnp.all(jnp.isfinite(out)))
    np.testing.assert_allclose(np.asarray(out), np.asarray(ref),
                               rtol=2e-2, atol=2e-2)
    print("KERNEL_OK")
</pallas_src>

<mosaic_0001>
module attributes {stable_mosaic.version = 11 : i64} {
  func.func @_srn_kernel(%arg0: memref<36x512xf32, #tpu.memory_space<vmem>>, %arg1: memref<216x36xf32, #tpu.memory_space<vmem>>, %arg2: memref<6x216xf32, #tpu.memory_space<vmem>>, %arg3: memref<6x512xf32, #tpu.memory_space<vmem>>) attributes {dimension_semantics = [], scalar_prefetch = 0 : i64, scratch_operands = 0 : i64, tpu.core_type = #tpu.core_type<tc>} {
    %c0 = arith.constant 0 : index
    %c0_0 = arith.constant 0 : index
    %0 = vector.load %arg0[%c0, %c0_0] : memref<36x512xf32, #tpu.memory_space<vmem>>, vector<36x512xf32>
    %cst = arith.constant dense<0.000000e+00> : vector<512xf32>
    %1 = vector.multi_reduction <add>, %0, %cst [0] : vector<36x512xf32> to vector<512xf32>
    %2 = vector.shape_cast %1 : vector<512xf32> to vector<1x512xf32>
    %cst_1 = arith.constant 3.600000e+01 : f32
    %3 = vector.broadcast %cst_1 : f32 to vector<1x512xf32>
    %4 = arith.divf %2, %3 : vector<1x512xf32>
    %5 = vector.broadcast %4 : vector<1x512xf32> to vector<36x512xf32>
    %6 = arith.subf %0, %5 : vector<36x512xf32>
    %7 = arith.mulf %6, %6 : vector<36x512xf32>
    %cst_2 = arith.constant dense<0.000000e+00> : vector<512xf32>
    %8 = vector.multi_reduction <add>, %7, %cst_2 [0] : vector<36x512xf32> to vector<512xf32>
    %9 = vector.shape_cast %8 : vector<512xf32> to vector<1x512xf32>
    %cst_3 = arith.constant 0.0285714287 : f32
    %10 = vector.broadcast %cst_3 : f32 to vector<1x512xf32>
    %11 = arith.mulf %9, %10 : vector<1x512xf32>
    %cst_4 = arith.constant 1.000000e-30 : f32
    %12 = vector.broadcast %cst_4 : f32 to vector<1x512xf32>
    %13 = arith.addf %11, %12 : vector<1x512xf32>
    %14 = math.rsqrt %13 : vector<1x512xf32>
    %15 = vector.broadcast %14 : vector<1x512xf32> to vector<36x512xf32>
    %16 = arith.mulf %0, %15 : vector<36x512xf32>
    %c0_5 = arith.constant 0 : index
    %c0_6 = arith.constant 0 : index
    %17 = vector.load %arg1[%c0_5, %c0_6] : memref<216x36xf32, #tpu.memory_space<vmem>>, vector<216x36xf32>
    %cst_7 = arith.constant dense<0.000000e+00> : vector<216x512xf32>
    %18 = tpu.matmul %17, %16, %cst_7 {dimension_numbers = #tpu.dot_dimension_numbers<[1], [0], [0], [1], [0, 0, 1, 1], [], []>} : vector<216x36xf32>, vector<36x512xf32>, vector<216x512xf32> -> vector<216x512xf32>
    %c0_8 = arith.constant 0 : index
    %c0_9 = arith.constant 0 : index
    %19 = vector.load %arg2[%c0_8, %c0_9] : memref<6x216xf32, #tpu.memory_space<vmem>>, vector<6x216xf32>
    %20 = arith.mulf %18, %18 : vector<216x512xf32>
    %cst_10 = arith.constant dense<0.000000e+00> : vector<6x512xf32>
    %21 = tpu.matmul %19, %20, %cst_10 {dimension_numbers = #tpu.dot_dimension_numbers<[1], [0], [0], [1], [0, 0, 1, 1], [], []>} : vector<6x216xf32>, vector<216x512xf32>, vector<6x512xf32> -> vector<6x512xf32>
    %cst_11 = arith.constant 0.000000e+00 : f32
    %22 = vector.broadcast %cst_11 : f32 to vector<6x512xf32>
    %23 = arith.subf %22, %21 : vector<6x512xf32>
    %24 = math.exp %23 : vector<6x512xf32>
    %cst_12 = arith.constant 1.58197665 : f32
    %25 = vector.broadcast %cst_12 : f32 to vector<6x512xf32>
    %26 = arith.mulf %24, %25 : vector<6x512xf32>
    %cst_13 = arith.constant -1.08197665 : f32
    %27 = vector.broadcast %cst_13 : f32 to vector<6x512xf32>
    %28 = arith.addf %26, %27 : vector<6x512xf32>
    %c0_14 = arith.constant 0 : index
    %c0_15 = arith.constant 0 : index
    %29 = vector.load %arg3[%c0_14, %c0_15] : memref<6x512xf32, #tpu.memory_space<vmem>>, vector<6x512xf32>
    tpu.vector_store %arg3[%c0_14, %c0_15], %28 {strides = array<i32>} : memref<6x512xf32, #tpu.memory_space<vmem>>, vector<6x512xf32>,
    return
  }
}

</mosaic_0001>

<llo_original>
// kernel: tpu_custom_call.1
$region0: #{tpu_custom_call.1}
  #allocation0 [shape = 'u32[]', space=smem, size = 0x4, offset = 0x4, fixed_abs, tag = 'smem constant byte address 0x4 - core index']
  #allocation1 [shape = 'u32[144,128]{1,0:T(1,128)}', space=vmem, size = 0x12000, scoped, tag = 'internal scratch']
  %s0 = inlined_call_operand.vmem [shape: f32[36,512], index: 0, kind: input, shape index: {}]
  %s1 = inlined_call_operand.vmem [shape: f32[216,36], index: 1, kind: input, shape index: {}]
  %s2 = inlined_call_operand.vmem [shape: f32[6,216], index: 2, kind: input, shape index: {}]
  %s3 = inlined_call_operand.hbm [shape: f32[6,512], index: 3, kind: output, shape index: {}]
  %s4 = sld [smem:[#allocation0]]
  $region22: #{tpu_custom_call.1} parent=0
    _
  %s6 = ssub.s32 1, %s4
  %s7 = scalar_select 0, %s6, %s4
  $region1: #{tpu_custom_call.1} parent=0
    #allocation2 [shape = 'u8[16384]{0}', space=vmem, size = 0x4000, scoped, tag = 'output window, operand 0, single buffered']
    #allocation3 [shape = 's32[1]{0}', space=sflag, size = 0x4, scoped, tag = 'scoped memory for tpu_custom_call.1']
    %8 = vsyncpa [#allocation3], 0
    // Predicated region
    $region2: #{tpu_custom_call.1} parent=1 // pred_check
      _
    $region3: #{tpu_custom_call.1} parent=1 // pred_check_branch
      %10 = sbr.rel (0) target = $region5
    $region4: #{tpu_custom_call.1} parent=1 // pred_region
      _
    $region5: #{tpu_custom_call.1} parent=1 // pred_fallthru
      _
    // Predicated region
    $region6: #{tpu_custom_call.1} parent=1 // pred_check
      _
    $region7: #{tpu_custom_call.1} parent=1 // pred_check_branch
      %12 = sbr.rel (0) target = $region9
    $region8: #{tpu_custom_call.1} parent=1 // pred_region
      _
    $region9: #{tpu_custom_call.1} parent=1 // pred_fallthru
      _
    // Predicated region
    $region10: #{tpu_custom_call.1} parent=1 // pred_check
      _
    $region11: #{tpu_custom_call.1} parent=1 // pred_check_branch
      %14 = sbr.rel (0) target = $region13
    $region12: #{tpu_custom_call.1} parent=1 // pred_region
      _
    $region13: #{tpu_custom_call.1} parent=1 // pred_fallthru
      _
    %v15 = vld [vmem:[%s0] sm:$0xff]
    %v16 = vld [vmem:[%s0 + $0x8] sm:$0xff]
    %v17 = vld [vmem:[%s0 + $0x10] sm:$0xff]
    %v18 = vld [vmem:[%s0 + $0x18] sm:$0xff]
    %v19 = vld [vmem:[%s0 + $0x20] sm:$0xff]
    %v20 = vld [vmem:[%s0 + $0x28] sm:$0xff]
    %v21 = vld [vmem:[%s0 + $0x30] sm:$0xff]
    %v22 = vld [vmem:[%s0 + $0x38] sm:$0xff]
    %v23 = vld [vmem:[%s0 + $0x40] sm:$0xff]
    %v24 = vld [vmem:[%s0 + $0x48] sm:$0xff]
    %v25 = vld [vmem:[%s0 + $0x50] sm:$0xff]
    %v26 = vld [vmem:[%s0 + $0x58] sm:$0xff]
    %v27 = vld [vmem:[%s0 + $0x60] sm:$0xff]
    %v28 = vld [vmem:[%s0 + $0x68] sm:$0xff]
    %v29 = vld [vmem:[%s0 + $0x70] sm:$0xff]
    %v30 = vld [vmem:[%s0 + $0x78] sm:$0xff]
    %v31 = vld [vmem:[%s0 + $0x80] sm:$0xf]
    %v32 = vld [vmem:[%s0 + $0x88] sm:$0xf]
    %v33 = vld [vmem:[%s0 + $0x90] sm:$0xf]
    %v34 = vld [vmem:[%s0 + $0x98] sm:$0xf]
    %v35 = vadd.f32 %v15, %v19
    %v36 = vadd.f32 %v35, %v23
    %v37 = vadd.f32 %v36, %v27
    %vm38 = vcmask 1043456
    %v39 = vsel %vm38, %v31, 0.0
    %v40 = vadd.f32 %v37, %v39
    %v41 = vrot.slane %v40, 4
    %v42 = vadd.f32 %v40, %v41
    %v43 = vrot.slane %v42, 2
    %v44 = vadd.f32 %v42, %v43
    %v45 = vrot.slane %v44, 1
    %v46 = vadd.f32 %v44, %v45
    %v47 = vadd.f32 %v16, %v20
    %v48 = vadd.f32 %v47, %v24
    %v49 = vadd.f32 %v48, %v28
    %v50 = vsel %vm38, %v32, 0.0
    %v51 = vadd.f32 %v49, %v50
    %v52 = vrot.slane %v51, 4
    %v53 = vadd.f32 %v51, %v52
    %v54 = vrot.slane %v53, 2
    %v55 = vadd.f32 %v53, %v54
    %v56 = vrot.slane %v55, 1
    %v57 = vadd.f32 %v55, %v56
    %v58 = vadd.f32 %v17, %v21
    %v59 = vadd.f32 %v58, %v25
    %v60 = vadd.f32 %v59, %v29
    %v61 = vsel %vm38, %v33, 0.0
    %v62 = vadd.f32 %v60, %v61
    %v63 = vrot.slane %v62, 4
    %v64 = vadd.f32 %v62, %v63
    %v65 = vrot.slane %v64, 2
    %v66 = vadd.f32 %v64, %v65
    %v67 = vrot.slane %v66, 1
    %v68 = vadd.f32 %v66, %v67
    %v69 = vadd.f32 %v18, %v22
    %v70 = vadd.f32 %v69, %v26
    %v71 = vadd.f32 %v70, %v30
    %v72 = vsel %vm38, %v34, 0.0
    %v73 = vadd.f32 %v71, %v72
    %v74 = vrot.slane %v73, 4
    %v75 = vadd.f32 %v73, %v74
    %v76 = vrot.slane %v75, 2
    %v77 = vadd.f32 %v75, %v76
    %v78 = vrot.slane %v77, 1
    %v79 = vadd.f32 %v77, %v78
    %v80 = vrcp.pop 36.0
    %v81 = vmul.f32 %v46, %v80
    %v82 = vmul.f32 %v57, %v80
    %v83 = vmul.f32 %v68, %v80
    %v84 = vmul.f32 %v79, %v80
    %v85 = vsub.f32 %v15, %v81
    %v86 = vsub.f32 %v16, %v82
    %v87 = vsub.f32 %v17, %v83
    %v88 = vsub.f32 %v18, %v84
    %v89 = vsub.f32 %v19, %v81
    %v90 = vsub.f32 %v20, %v82
    %v91 = vsub.f32 %v21, %v83
    %v92 = vsub.f32 %v22, %v84
    %v93 = vsub.f32 %v23, %v81
    %v94 = vsub.f32 %v24, %v82
    %v95 = vsub.f32 %v25, %v83
    %v96 = vsub.f32 %v26, %v84
    %v97 = vsub.f32 %v27, %v81
    %v98 = vsub.f32 %v28, %v82
    %v99 = vsub.f32 %v29, %v83
    %v100 = vsub.f32 %v30, %v84
    %v101 = vsub.f32 %v31, %v81
    %v102 = vsub.f32 %v32, %v82
    %v103 = vsub.f32 %v33, %v83
    %v104 = vsub.f32 %v34, %v84
    %v105 = vmul.f32 %v85, %v85
    %v106 = vmul.f32 %v86, %v86
    %v107 = vmul.f32 %v87, %v87
    %v108 = vmul.f32 %v88, %v88
    %v109 = vmul.f32 %v89, %v89
    %v110 = vmul.f32 %v90, %v90
    %v111 = vmul.f32 %v91, %v91
    %v112 = vmul.f32 %v92, %v92
    %v113 = vmul.f32 %v93, %v93
    %v114 = vmul.f32 %v94, %v94
    %v115 = vmul.f32 %v95, %v95
    %v116 = vmul.f32 %v96, %v96
    %v117 = vmul.f32 %v97, %v97
    %v118 = vmul.f32 %v98, %v98
    %v119 = vmul.f32 %v99, %v99
    %v120 = vmul.f32 %v100, %v100
    %v121 = vmul.f32 %v101, %v101
    %v122 = vmul.f32 %v102, %v102
    %v123 = vmul.f32 %v103, %v103
    %v124 = vmul.f32 %v104, %v104
    %v125 = vadd.f32 %v105, %v109
    %v126 = vadd.f32 %v125, %v113
    %v127 = vadd.f32 %v126, %v117
    %v128 = vsel %vm38, %v121, 0.0
    %v129 = vadd.f32 %v127, %v128
    %v130 = vrot.slane %v129, 4
    %v131 = vadd.f32 %v129, %v130
    %v132 = vrot.slane %v131, 2
    %v133 = vadd.f32 %v131, %v132
    %v134 = vrot.slane %v133, 1
    %v135 = vadd.f32 %v133, %v134
    %v136 = vadd.f32 %v106, %v110
    %v137 = vadd.f32 %v136, %v114
    %v138 = vadd.f32 %v137, %v118
    %v139 = vsel %vm38, %v122, 0.0
    %v140 = vadd.f32 %v138, %v139
    %v141 = vrot.slane %v140, 4
    %v142 = vadd.f32 %v140, %v141
    %v143 = vrot.slane %v142, 2
    %v144 = vadd.f32 %v142, %v143
    %v145 = vrot.slane %v144, 1
    %v146 = vadd.f32 %v144, %v145
    %v147 = vadd.f32 %v107, %v111
    %v148 = vadd.f32 %v147, %v115
    %v149 = vadd.f32 %v148, %v119
    %v150 = vsel %vm38, %v123, 0.0
    %v151 = vadd.f32 %v149, %v150
    %v152 = vrot.slane %v151, 4
    %v153 = vadd.f32 %v151, %v152
    %v154 = vrot.slane %v153, 2
    %v155 = vadd.f32 %v153, %v154
    %v156 = vrot.slane %v155, 1
    %v157 = vadd.f32 %v155, %v156
    %v158 = vadd.f32 %v108, %v112
    %v159 = vadd.f32 %v158, %v116
    %v160 = vadd.f32 %v159, %v120
    %v161 = vsel %vm38, %v124, 0.0
    %v162 = vadd.f32 %v160, %v161
    %v163 = vrot.slane %v162, 4
    %v164 = vadd.f32 %v162, %v163
    %v165 = vrot.slane %v164, 2
    %v166 = vadd.f32 %v164, %v165
    %v167 = vrot.slane %v166, 1
    %v168 = vadd.f32 %v166, %v167
    %v169 = vmul.f32 %v135, 0.028571429
    %v170 = vmul.f32 %v146, 0.028571429
    %v171 = vmul.f32 %v157, 0.028571429
    %v172 = vmul.f32 %v168, 0.028571429
    %v173 = vadd.f32 %v169, 1e-30
    %v174 = vadd.f32 %v170, 1e-30
    %v175 = vadd.f32 %v171, 1e-30
    %v176 = vadd.f32 %v172, 1e-30
    %v177 = vrsqrt.pop %v173
    %v178 = vrsqrt.pop %v174
    %v179 = vrsqrt.pop %v175
    %v180 = vrsqrt.pop %v176
    %v181 = vmul.f32 %v15, %v177
    %v182 = vmul.f32 %v16, %v178
    %v183 = vmul.f32 %v17, %v179
    %v184 = vmul.f32 %v18, %v180
    %v185 = vmul.f32 %v19, %v177
    %v186 = vmul.f32 %v20, %v178
    %v187 = vmul.f32 %v21, %v179
    %v188 = vmul.f32 %v22, %v180
    %v189 = vmul.f32 %v23, %v177
    %v190 = vmul.f32 %v24, %v178
    %v191 = vmul.f32 %v25, %v179
    %v192 = vmul.f32 %v26, %v180
    %v193 = vmul.f32 %v27, %v177
    %v194 = vmul.f32 %v28, %v178
    %v195 = vmul.f32 %v29, %v179
    %v196 = vmul.f32 %v30, %v180
    %v197 = vmul.f32 %v31, %v177
    %v198 = vmul.f32 %v32, %v178
    %v199 = vmul.f32 %v33, %v179
    %v200 = vmul.f32 %v34, %v180
    %v201 = vld [vmem:[%s1] sm:$0xff]
    %v202 = vld [vmem:[%s1 + $0x8] sm:$0xff]
    %v203 = vld [vmem:[%s1 + $0x10] sm:$0xff]
    %v204 = vld [vmem:[%s1 + $0x18] sm:$0xff]
    %v205 = vld [vmem:[%s1 + $0x20] sm:$0xff]
    %v206 = vld [vmem:[%s1 + $0x28] sm:$0xff]
    %v207 = vld [vmem:[%s1 + $0x30] sm:$0xff]
    %v208 = vld [vmem:[%s1 + $0x38] sm:$0xff]
    %v209 = vld [vmem:[%s1 + $0x40] sm:$0xff]
    %v210 = vld [vmem:[%s1 + $0x48] sm:$0xff]
    %v211 = vld [vmem:[%s1 + $0x50] sm:$0xff]
    %v212 = vld [vmem:[%s1 + $0x58] sm:$0xff]
    %v213 = vld [vmem:[%s1 + $0x60] sm:$0xff]
    %v214 = vld [vmem:[%s1 + $0x68] sm:$0xff]
    %v215 = vld [vmem:[%s1 + $0x70] sm:$0xff]
    %v216 = vld [vmem:[%s1 + $0x78] sm:$0xff]
    %v217 = vld [vmem:[%s1 + $0x80] sm:$0xff]
    %v218 = vld [vmem:[%s1 + $0x88] sm:$0xff]
    %v219 = vld [vmem:[%s1 + $0x90] sm:$0xff]
    %v220 = vld [vmem:[%s1 + $0x98] sm:$0xff]
    %v221 = vld [vmem:[%s1 + $0xa0] sm:$0xff]
    %v222 = vld [vmem:[%s1 + $0xa8] sm:$0xff]
    %v223 = vld [vmem:[%s1 + $0xb0] sm:$0xff]
    %v224 = vld [vmem:[%s1 + $0xb8] sm:$0xff]
    %v225 = vld [vmem:[%s1 + $0xc0] sm:$0xff]
    %v226 = vld [vmem:[%s1 + $0xc8] sm:$0xff]
    %v227 = vld [vmem:[%s1 + $0xd0] sm:$0xff]
    %vm228 = vcmask 293888
    %v230 = vsel %vm228, %v201, 0
    %v233 = vsel %vm228, %v202, 0
    %v236 = vsel %vm228, %v203, 0
    %v239 = vsel %vm228, %v204, 0
    %v242 = vsel %vm228, %v205, 0
    %v245 = vsel %vm228, %v206, 0
    %v248 = vsel %vm228, %v207, 0
    %v251 = vsel %vm228, %v208, 0
    %v254 = vsel %vm228, %v209, 0
    %v257 = vsel %vm228, %v210, 0
    %v260 = vsel %vm228, %v211, 0
    %v263 = vsel %vm228, %v212, 0
    %v266 = vsel %vm228, %v213, 0
    %v269 = vsel %vm228, %v214, 0
    %v272 = vsel %vm228, %v215, 0
    %v275 = vsel %vm228, %v216, 0
    %v278 = vsel %vm228, %v217, 0
    %v281 = vsel %vm228, %v218, 0
    %v284 = vsel %vm228, %v219, 0
    %v287 = vsel %vm228, %v220, 0
    %v290 = vsel %vm228, %v221, 0
    %v293 = vsel %vm228, %v222, 0
    %v296 = vsel %vm228, %v223, 0
    %v299 = vsel %vm228, %v224, 0
    %v302 = vsel %vm228, %v225, 0
    %v305 = vsel %vm228, %v226, 0
    %v308 = vsel %vm228, %v227, 0
    %v311 = vsel %vm38, %v197, 0
    %v314 = vsel %vm38, %v198, 0
    %v317 = vsel %vm38, %v199, 0
    %v320 = vsel %vm38, %v200, 0
    %322 = vmatprep.subr.mxu0 %v182
    %323 = vmatpush1.msra.mxu0 %v181
    %324 = vmatprep.subr.mxu0 %v186
    %325 = vmatpush1.msra.mxu0 %v185
    %326 = vmatprep.subr.mxu0 %v190
    %327 = vmatpush1.msra.mxu0 %v189
    %328 = vmatprep.subr.mxu0 %v194
    %329 = vmatpush1.msra.mxu0 %v193
    %330 = vmatprep.subr.mxu0 %v314
    %331 = vmatpush1.msra.mxu0 %v311
    %332 = vmatprep.subr.mxu0 0.0
    %333 = vmatpush1.msra.mxu0 0.0
    %334 = vmatprep.subr.mxu0 0.0
    %335 = vmatpush1.msra.mxu0 0.0
    %336 = vmatprep.subr.mxu0 0.0
    %337 = vmatpush1.msra.mxu0 0.0
    %338 = vmatprep.subr.mxu0 0.0
    %339 = vmatpush1.msra.mxu0 0.0
    %340 = vmatprep.subr.mxu0 0.0
    %341 = vmatpush1.msra.mxu0 0.0
    %342 = vmatprep.subr.mxu0 0.0
    %343 = vmatpush1.msra.mxu0 0.0
    %344 = vmatprep.subr.mxu0 0.0
    %345 = vmatpush1.msra.mxu0 0.0
    %346 = vmatprep.subr.mxu0 0.0
    %347 = vmatpush1.msra.mxu0 0.0
    %348 = vmatprep.subr.mxu0 0.0
    %349 = vmatpush1.msra.mxu0 0.0
    %350 = vmatprep.subr.mxu0 0.0
    %351 = vmatpush1.msra.mxu0 0.0
    %352 = vmatprep.subr.mxu0 0.0
    %353 = vmatpush1.msra.mxu0 0.0
    %354 = vmatprep.subr.mxu0 0.0
    %355 = vmatpush1.msra.mxu0 0.0
    %356 = vmatprep.subr.mxu0 0.0
    %357 = vmatpush1.msra.mxu0 0.0
    %358 = vmatprep.subr.mxu0 0.0
    %359 = vmatpush1.msra.mxu0 0.0
    %360 = vmatprep.subr.mxu0 0.0
    %361 = vmatpush1.msra.mxu0 0.0
    %362 = vmatprep.subr.mxu0 0.0
    %363 = vmatpush1.msra.mxu0 0.0
    %364 = vmatprep.subr.mxu0 0.0
    %365 = vmatpush1.msra.mxu0 0.0
    %366 = vmatprep.subr.mxu0 0.0
    %367 = vmatpush1.msra.mxu0 0.0
    %368 = vmatprep.subr.mxu0 0.0
    %369 = vmatpush1.msra.mxu0 0.0
    %370 = vmatprep.subr.mxu0 0.0
    %371 = vmatpush1.msra.mxu0 0.0
    %372 = vmatprep.subr.mxu0 0.0
    %373 = vmatpush1.msra.mxu0 0.0
    %374 = vmatprep.subr.mxu0 0.0
    %375 = vmatpush1.msra.mxu0 0.0
    %376 = vmatprep.subr.mxu0 0.0
    %377 = vmatpush1.msra.mxu0 0.0
    %378 = vmatprep.subr.mxu0 0.0
    %379 = vmatpush1.msra.mxu0 0.0
    %380 = vmatprep.subr.mxu0 0.0
    %381 = vmatpush1.msra.mxu0 0.0
    %382 = vmatprep.subr.mxu0 0.0
    %383 = vmatpush1.msra.mxu0 0.0
    %384 = vmatprep.subr.mxu0 0.0
    %385 = vmatpush1.msra.mxu0 0.0
    %386 = vmatprep.mubr.f32.mxu0 0.0
    %387 = vmatmul.mubr.f32.gmra.mrb[0].mxu0 %v230
    %v388 = vpop.f32.mrb[0].mxu0
    %v389 = vadd.f32 0.0, %v388
    %v390 = vpop.f32.mrb[0].mxu0
    %v391 = vadd.f32 0.0, %v390
    %392 = vmatprep.mubr.f32.mxu0 0.0
    %393 = vmatmul.mubr.f32.gmra.mrb[0].mxu0 %v233
    %v394 = vpop.f32.mrb[0].mxu0
    %v395 = vadd.f32 0.0, %v394
    %v396 = vpop.f32.mrb[0].mxu0
    %v397 = vadd.f32 0.0, %v396
    %398 = vmatprep.mubr.f32.mxu0 0.0
    %399 = vmatmul.mubr.f32.gmra.mrb[0].mxu0 %v236
    %v400 = vpop.f32.mrb[0].mxu0
    %v401 = vadd.f32 0.0, %v400
    %v402 = vpop.f32.mrb[0].mxu0
    %v403 = vadd.f32 0.0, %v402
    %404 = vmatprep.mubr.f32.mxu0 0.0
    %405 = vmatmul.mubr.f32.gmra.mrb[0].mxu0 %v239
    %v406 = vpop.f32.mrb[0].mxu0
    %v407 = vadd.f32 0.0, %v406
    %v408 = vpop.f32.mrb[0].mxu0
    %v409 = vadd.f32 0.0, %v408
    %410 = vmatprep.mubr.f32.mxu0 0.0
    %411 = vmatmul.mubr.f32.gmra.mrb[0].mxu0 %v242
    %v412 = vpop.f32.mrb[0].mxu0
    %v413 = vadd.f32 0.0, %v412
    %v414 = vpop.f32.mrb[0].mxu0
    %v415 = vadd.f32 0.0, %v414
    %416 = vmatprep.mubr.f32.mxu0 0.0
    %417 = vmatmul.mubr.f32.gmra.mrb[0].mxu0 %v245
    %v418 = vpop.f32.mrb[0].mxu0
    %v419 = vadd.f32 0.0, %v418
    %v420 = vpop.f32.mrb[0].mxu0
    %v421 = vadd.f32 0.0, %v420
    %422 = vmatprep.mubr.f32.mxu0 0.0
    %423 = vmatmul.mubr.f32.gmra.mrb[0].mxu0 %v248
    %v424 = vpop.f32.mrb[0].mxu0
    %v425 = vadd.f32 0.0, %v424
    %v426 = vpop.f32.mrb[0].mxu0
    %v427 = vadd.f32 0.0, %v426
    %428 = vmatprep.mubr.f32.mxu0 0.0
    %429 = vmatmul.mubr.f32.gmra.mrb[0].mxu0 %v251
    %v430 = vpop.f32.mrb[0].mxu0
    %v431 = vadd.f32 0.0, %v430
    %v432 = vpop.f32.mrb[0].mxu0
    %v433 = vadd.f32 0.0, %v432
    %434 = vmatprep.mubr.f32.mxu0 0.0
    %435 = vmatmul.mubr.f32.gmra.mrb[0].mxu0 %v254
    %v436 = vpop.f32.mrb[0].mxu0
    %v437 = vadd.f32 0.0, %v436
    %v438 = vpop.f32.mrb[0].mxu0
    %v439 = vadd.f32 0.0, %v438
    %440 = vmatprep.mubr.f32.mxu0 0.0
    %441 = vmatmul.mubr.f32.gmra.mrb[0].mxu0 %v257
    %v442 = vpop.f32.mrb[0].mxu0
    %v443 = vadd.f32 0.0, %v442
    %v444 = vpop.f32.mrb[0].mxu0
    %v445 = vadd.f32 0.0, %v444
    %446 = vmatprep.mubr.f32.mxu0 0.0
    %447 = vmatmul.mubr.f32.gmra.mrb[0].mxu0 %v260
    %v448 = vpop.f32.mrb[0].mxu0
    %v449 = vadd.f32 0.0, %v448
    %v450 = vpop.f32.mrb[0].mxu0
    %v451 = vadd.f32 0.0, %v450
    %452 = vmatprep.mubr.f32.mxu0 0.0
    %453 = vmatmul.mubr.f32.gmra.mrb[0].mxu0 %v263
    %v454 = vpop.f32.mrb[0].mxu0
    %v455 = vadd.f32 0.0, %v454
    %v456 = vpop.f32.mrb[0].mxu0
    %v457 = vadd.f32 0.0, %v456
    %458 = vmatprep.mubr.f32.mxu0 0.0
    %459 = vmatmul.mubr.f32.gmra.mrb[0].mxu0 %v266
    %v460 = vpop.f32.mrb[0].mxu0
    %v461 = vadd.f32 0.0, %v460
    %v462 = vpop.f32.mrb[0].mxu0
    %v463 = vadd.f32 0.0, %v462
    %464 = vmatprep.mubr.f32.mxu0 0.0
    %465 = vmatmul.mubr.f32.gmra.mrb[0].mxu0 %v269
    %v466 = vpop.f32.mrb[0].mxu0
    %v467 = vadd.f32 0.0, %v466
    %v468 = vpop.f32.mrb[0].mxu0
    %v469 = vadd.f32 0.0, %v468
    %470 = vmatprep.mubr.f32.mxu0 0.0
    %471 = vmatmul.mubr.f32.gmra.mrb[0].mxu0 %v272
    %v472 = vpop.f32.mrb[0].mxu0
    %v473 = vadd.f32 0.0, %v472
    %v474 = vpop.f32.mrb[0].mxu0
    %v475 = vadd.f32 0.0, %v474
    %476 = vmatprep.mubr.f32.mxu0 0.0
    %477 = vmatmul.mubr.f32.gmra.mrb[0].mxu0 %v275
    %v478 = vpop.f32.mrb[0].mxu0
    %v479 = vadd.f32 0.0, %v478
    %v480 = vpop.f32.mrb[0].mxu0
    %v481 = vadd.f32 0.0, %v480
    %482 = vmatprep.mubr.f32.mxu0 0.0
    %483 = vmatmul.mubr.f32.gmra.mrb[0].mxu0 %v278
    %v484 = vpop.f32.mrb[0].mxu0
    %v485 = vadd.f32 0.0, %v484
    %v486 = vpop.f32.mrb[0].mxu0
    %v487 = vadd.f32 0.0, %v486
    %488 = vmatprep.mubr.f32.mxu0 0.0
    %489 = vmatmul.mubr.f32.gmra.mrb[0].mxu0 %v281
    %v490 = vpop.f32.mrb[0].mxu0
    %v491 = vadd.f32 0.0, %v490
    %v492 = vpop.f32.mrb[0].mxu0
    %v493 = vadd.f32 0.0, %v492
    %494 = vmatprep.mubr.f32.mxu0 0.0
    %495 = vmatmul.mubr.f32.gmra.mrb[0].mxu0 %v284
    %v496 = vpop.f32.mrb[0].mxu0
    %v497 = vadd.f32 0.0, %v496
    %v498 = vpop.f32.mrb[0].mxu0
    %v499 = vadd.f32 0.0, %v498
    %500 = vmatprep.mubr.f32.mxu0 0.0
    %501 = vmatmul.mubr.f32.gmra.mrb[0].mxu0 %v287
    %v502 = vpop.f32.mrb[0].mxu0
    %v503 = vadd.f32 0.0, %v502
    %v504 = vpop.f32.mrb[0].mxu0
    %v505 = vadd.f32 0.0, %v504
    %506 = vmatprep.mubr.f32.mxu0 0.0
    %507 = vmatmul.mubr.f32.gmra.mrb[0].mxu0 %v290
    %v508 = vpop.f32.mrb[0].mxu0
    %v509 = vadd.f32 0.0, %v508
    %v510 = vpop.f32.mrb[0].mxu0
    %v511 = vadd.f32 0.0, %v510
    %512 = vmatprep.mubr.f32.mxu0 0.0
    %513 = vmatmul.mubr.f32.gmra.mrb[0].mxu0 %v293
    %v514 = vpop.f32.mrb[0].mxu0
    %v515 = vadd.f32 0.0, %v514
    %v516 = vpop.f32.mrb[0].mxu0
    %v517 = vadd.f32 0.0, %v516
    %518 = vmatprep.mubr.f32.mxu0 0.0
    %519 = vmatmul.mubr.f32.gmra.mrb[0].mxu0 %v296
    %v520 = vpop.f32.mrb[0].mxu0
    %v521 = vadd.f32 0.0, %v520
    %v522 = vpop.f32.mrb[0].mxu0
    %v523 = vadd.f32 0.0, %v522
    %524 = vmatprep.mubr.f32.mxu0 0.0
    %525 = vmatmul.mubr.f32.gmra.mrb[0].mxu0 %v299
    %v526 = vpop.f32.mrb[0].mxu0
    %v527 = vadd.f32 0.0, %v526
    %v528 = vpop.f32.mrb[0].mxu0
    %v529 = vadd.f32 0.0, %v528
    %530 = vmatprep.mubr.f32.mxu0 0.0
    %531 = vmatmul.mubr.f32.gmra.mrb[0].mxu0 %v302
    %v532 = vpop.f32.mrb[0].mxu0
    %v533 = vadd.f32 0.0, %v532
    %v534 = vpop.f32.mrb[0].mxu0
    %v535 = vadd.f32 0.0, %v534
    %536 = vmatprep.mubr.f32.mxu0 0.0
    %537 = vmatmul.mubr.f32.gmra.mrb[0].mxu0 %v305
    %v538 = vpop.f32.mrb[0].mxu0
    %v539 = vadd.f32 0.0, %v538
    %v540 = vpop.f32.mrb[0].mxu0
    %v541 = vadd.f32 0.0, %v540
    %542 = vmatprep.mubr.f32.mxu0 0.0
    %543 = vmatmul.mubr.f32.gmra.mrb[0].mxu0 %v308
    %v544 = vpop.f32.mrb[0].mxu0
    %v545 = vadd.f32 0.0, %v544
    %v546 = vpop.f32.mrb[0].mxu0
    %v547 = vadd.f32 0.0, %v546
    %548 = vdwg.mxu0
    %549 = vmatprep.subr.mxu0 %v184
    %550 = vmatpush1.msra.mxu0 %v183
    %551 = vmatprep.subr.mxu0 %v188
    %552 = vmatpush1.msra.mxu0 %v187
    %553 = vmatprep.subr.mxu0 %v192
    %554 = vmatpush1.msra.mxu0 %v191
    %555 = vmatprep.subr.mxu0 %v196
    %556 = vmatpush1.msra.mxu0 %v195
    %557 = vmatprep.subr.mxu0 %v320
    %558 = vmatpush1.msra.mxu0 %v317
    %559 = vmatprep.subr.mxu0 0.0
    %560 = vmatpush1.msra.mxu0 0.0
    %561 = vmatprep.subr.mxu0 0.0
    %562 = vmatpush1.msra.mxu0 0.0
    %563 = vmatprep.subr.mxu0 0.0
    %564 = vmatpush1.msra.mxu0 0.0
    %565 = vmatprep.subr.mxu0 0.0
    %566 = vmatpush1.msra.mxu0 0.0
    %567 = vmatprep.subr.mxu0 0.0
    %568 = vmatpush1.msra.mxu0 0.0
    %569 = vmatprep.subr.mxu0 0.0
    %570 = vmatpush1.msra.mxu0 0.0
    %571 = vmatprep.subr.mxu0 0.0
    %572 = vmatpush1.msra.mxu0 0.0
    %573 = vmatprep.subr.mxu0 0.0
    %574 = vmatpush1.msra.mxu0 0.0
    %575 = vmatprep.subr.mxu0 0.0
    %576 = vmatpush1.msra.mxu0 0.0
    %577 = vmatprep.subr.mxu0 0.0
    %578 = vmatpush1.msra.mxu0 0.0
    %579 = vmatprep.subr.mxu0 0.0
    %580 = vmatpush1.msra.mxu0 0.0
    %581 = vmatprep.subr.mxu0 0.0
    %582 = vmatpush1.msra.mxu0 0.0
    %583 = vmatprep.subr.mxu0 0.0
    %584 = vmatpush1.msra.mxu0 0.0
    %585 = vmatprep.subr.mxu0 0.0
    %586 = vmatpush1.msra.mxu0 0.0
    %587 = vmatprep.subr.mxu0 0.0
    %588 = vmatpush1.msra.mxu0 0.0
    %589 = vmatprep.subr.mxu0 0.0
    %590 = vmatpush1.msra.mxu0 0.0
    %591 = vmatprep.subr.mxu0 0.0
    %592 = vmatpush1.msra.mxu0 0.0
    %593 = vmatprep.subr.mxu0 0.0
    %594 = vmatpush1.msra.mxu0 0.0
    %595 = vmatprep.subr.mxu0 0.0
    %596 = vmatpush1.msra.mxu0 0.0
    %597 = vmatprep.subr.mxu0 0.0
    %598 = vmatpush1.msra.mxu0 0.0
    %599 = vmatprep.subr.mxu0 0.0
    %600 = vmatpush1.msra.mxu0 0.0
    %601 = vmatprep.subr.mxu0 0.0
    %602 = vmatpush1.msra.mxu0 0.0
    %603 = vmatprep.subr.mxu0 0.0
    %604 = vmatpush1.msra.mxu0 0.0
    %605 = vmatprep.subr.mxu0 0.0
    %606 = vmatpush1.msra.mxu0 0.0
    %607 = vmatprep.subr.mxu0 0.0
    %608 = vmatpush1.msra.mxu0 0.0
    %609 = vmatprep.subr.mxu0 0.0
    %610 = vmatpush1.msra.mxu0 0.0
    %611 = vmatprep.subr.mxu0 0.0
    %612 = vmatpush1.msra.mxu0 0.0
    %613 = vmatprep.mubr.f32.mxu0 0.0
    %614 = vmatmul.mubr.f32.gmra.mrb[0].mxu0 %v230
    %v615 = vpop.f32.mrb[0].mxu0
    %v616 = vadd.f32 0.0, %v615
    %v617 = vpop.f32.mrb[0].mxu0
    %v618 = vadd.f32 0.0, %v617
    %619 = vmatprep.mubr.f32.mxu0 0.0
    %620 = vmatmul.mubr.f32.gmra.mrb[0].mxu0 %v233
    %v621 = vpop.f32.mrb[0].mxu0
    %v622 = vadd.f32 0.0, %v621
    %v623 = vpop.f32.mrb[0].mxu0
    %v624 = vadd.f32 0.0, %v623
    %625 = vmatprep.mubr.f32.mxu0 0.0
    %626 = vmatmul.mubr.f32.gmra.mrb[0].mxu0 %v236
    %v627 = vpop.f32.mrb[0].mxu0
    %v628 = vadd.f32 0.0, %v627
    %v629 = vpop.f32.mrb[0].mxu0
    %v630 = vadd.f32 0.0, %v629
    %631 = vmatprep.mubr.f32.mxu0 0.0
    %632 = vmatmul.mubr.f32.gmra.mrb[0].mxu0 %v239
    %v633 = vpop.f32.mrb[0].mxu0
    %v634 = vadd.f32 0.0, %v633
    %v635 = vpop.f32.mrb[0].mxu0
    %v636 = vadd.f32 0.0, %v635
    %637 = vmatprep.mubr.f32.mxu0 0.0
    %638 = vmatmul.mubr.f32.gmra.mrb[0].mxu0 %v242
    %v639 = vpop.f32.mrb[0].mxu0
    %v640 = vadd.f32 0.0, %v639
    %v641 = vpop.f32.mrb[0].mxu0
    %v642 = vadd.f32 0.0, %v641
    %643 = vmatprep.mubr.f32.mxu0 0.0
    %644 = vmatmul.mubr.f32.gmra.mrb[0].mxu0 %v245
    %v645 = vpop.f32.mrb[0].mxu0
    %v646 = vadd.f32 0.0, %v645
    %v647 = vpop.f32.mrb[0].mxu0
    %v648 = vadd.f32 0.0, %v647
    %649 = vmatprep.mubr.f32.mxu0 0.0
    %650 = vmatmul.mubr.f32.gmra.mrb[0].mxu0 %v248
    %v651 = vpop.f32.mrb[0].mxu0
    %v652 = vadd.f32 0.0, %v651
    %v653 = vpop.f32.mrb[0].mxu0
    %v654 = vadd.f32 0.0, %v653
    %655 = vmatprep.mubr.f32.mxu0 0.0
    %656 = vmatmul.mubr.f32.gmra.mrb[0].mxu0 %v251
    %v657 = vpop.f32.mrb[0].mxu0
    %v658 = vadd.f32 0.0, %v657
    %v659 = vpop.f32.mrb[0].mxu0
    %v660 = vadd.f32 0.0, %v659
    %661 = vmatprep.mubr.f32.mxu0 0.0
    %662 = vmatmul.mubr.f32.gmra.mrb[0].mxu0 %v254
    %v663 = vpop.f32.mrb[0].mxu0
    %v664 = vadd.f32 0.0, %v663
    %v665 = vpop.f32.mrb[0].mxu0
    %v666 = vadd.f32 0.0, %v665
    %667 = vmatprep.mubr.f32.mxu0 0.0
    %668 = vmatmul.mubr.f32.gmra.mrb[0].mxu0 %v257
    %v669 = vpop.f32.mrb[0].mxu0
    %v670 = vadd.f32 0.0, %v669
    %v671 = vpop.f32.mrb[0].mxu0
    %v672 = vadd.f32 0.0, %v671
    %673 = vmatprep.mubr.f32.mxu0 0.0
    %674 = vmatmul.mubr.f32.gmra.mrb[0].mxu0 %v260
    %v675 = vpop.f32.mrb[0].mxu0
    %v676 = vadd.f32 0.0, %v675
    %v677 = vpop.f32.mrb[0].mxu0
    %v678 = vadd.f32 0.0, %v677
    %679 = vmatprep.mubr.f32.mxu0 0.0
    %680 = vmatmul.mubr.f32.gmra.mrb[0].mxu0 %v263
    %v681 = vpop.f32.mrb[0].mxu0
    %v682 = vadd.f32 0.0, %v681
    %v683 = vpop.f32.mrb[0].mxu0
    %v684 = vadd.f32 0.0, %v683
    %685 = vmatprep.mubr.f32.mxu0 0.0
    %686 = vmatmul.mubr.f32.gmra.mrb[0].mxu0 %v266
    %v687 = vpop.f32.mrb[0].mxu0
    %v688 = vadd.f32 0.0, %v687
    %v689 = vpop.f32.mrb[0].mxu0
    %v690 = vadd.f32 0.0, %v689
    %691 = vmatprep.mubr.f32.mxu0 0.0
    %692 = vmatmul.mubr.f32.gmra.mrb[0].mxu0 %v269
    %v693 = vpop.f32.mrb[0].mxu0
    %v694 = vadd.f32 0.0, %v693
    %v695 = vpop.f32.mrb[0].mxu0
    %v696 = vadd.f32 0.0, %v695
    %697 = vmatprep.mubr.f32.mxu0 0.0
    %698 = vmatmul.mubr.f32.gmra.mrb[0].mxu0 %v272
    %v699 = vpop.f32.mrb[0].mxu0
    %v700 = vadd.f32 0.0, %v699
    %v701 = vpop.f32.mrb[0].mxu0
    %v702 = vadd.f32 0.0, %v701
    %703 = vmatprep.mubr.f32.mxu0 0.0
    %704 = vmatmul.mubr.f32.gmra.mrb[0].mxu0 %v275
    %v705 = vpop.f32.mrb[0].mxu0
    %v706 = vadd.f32 0.0, %v705
    %v707 = vpop.f32.mrb[0].mxu0
    %v708 = vadd.f32 0.0, %v707
    %709 = vmatprep.mubr.f32.mxu0 0.0
    %710 = vmatmul.mubr.f32.gmra.mrb[0].mxu0 %v278
    %v711 = vpop.f32.mrb[0].mxu0
    %v712 = vadd.f32 0.0, %v711
    %v713 = vpop.f32.mrb[0].mxu0
    %v714 = vadd.f32 0.0, %v713
    %715 = vmatprep.mubr.f32.mxu0 0.0
    %716 = vmatmul.mubr.f32.gmra.mrb[0].mxu0 %v281
    %v717 = vpop.f32.mrb[0].mxu0
    %v718 = vadd.f32 0.0, %v717
    %v719 = vpop.f32.mrb[0].mxu0
    %v720 = vadd.f32 0.0, %v719
    %721 = vmatprep.mubr.f32.mxu0 0.0
    %722 = vmatmul.mubr.f32.gmra.mrb[0].mxu0 %v284
    %v723 = vpop.f32.mrb[0].mxu0
    %v724 = vadd.f32 0.0, %v723
    %v725 = vpop.f32.mrb[0].mxu0
    %v726 = vadd.f32 0.0, %v725
    %727 = vmatprep.mubr.f32.mxu0 0.0
    %728 = vmatmul.mubr.f32.gmra.mrb[0].mxu0 %v287
    %v729 = vpop.f32.mrb[0].mxu0
    %v730 = vadd.f32 0.0, %v729
    %v731 = vpop.f32.mrb[0].mxu0
    %v732 = vadd.f32 0.0, %v731
    %733 = vmatprep.mubr.f32.mxu0 0.0
    %734 = vmatmul.mubr.f32.gmra.mrb[0].mxu0 %v290
    %v735 = vpop.f32.mrb[0].mxu0
    %v736 = vadd.f32 0.0, %v735
    %v737 = vpop.f32.mrb[0].mxu0
    %v738 = vadd.f32 0.0, %v737
    %739 = vmatprep.mubr.f32.mxu0 0.0
    %740 = vmatmul.mubr.f32.gmra.mrb[0].mxu0 %v293
    %v741 = vpop.f32.mrb[0].mxu0
    %v742 = vadd.f32 0.0, %v741
    %v743 = vpop.f32.mrb[0].mxu0
    %v744 = vadd.f32 0.0, %v743
    %745 = vmatprep.mubr.f32.mxu0 0.0
    %746 = vmatmul.mubr.f32.gmra.mrb[0].mxu0 %v296
    %v747 = vpop.f32.mrb[0].mxu0
    %v748 = vadd.f32 0.0, %v747
    %v749 = vpop.f32.mrb[0].mxu0
    %v750 = vadd.f32 0.0, %v749
    %751 = vmatprep.mubr.f32.mxu0 0.0
    %752 = vmatmul.mubr.f32.gmra.mrb[0].mxu0 %v299
    %v753 = vpop.f32.mrb[0].mxu0
    %v754 = vadd.f32 0.0, %v753
    %v755 = vpop.f32.mrb[0].mxu0
    %v756 = vadd.f32 0.0, %v755
    %757 = vmatprep.mubr.f32.mxu0 0.0
    %758 = vmatmul.mubr.f32.gmra.mrb[0].mxu0 %v302
    %v759 = vpop.f32.mrb[0].mxu0
    %v760 = vadd.f32 0.0, %v759
    %v761 = vpop.f32.mrb[0].mxu0
    %v762 = vadd.f32 0.0, %v761
    %763 = vmatprep.mubr.f32.mxu0 0.0
    %764 = vmatmul.mubr.f32.gmra.mrb[0].mxu0 %v305
    %v765 = vpop.f32.mrb[0].mxu0
    %v766 = vadd.f32 0.0, %v765
    %v767 = vpop.f32.mrb[0].mxu0
    %v768 = vadd.f32 0.0, %v767
    %769 = vmatprep.mubr.f32.mxu0 0.0
    %770 = vmatmul.mubr.f32.gmra.mrb[0].mxu0 %v308
    %v771 = vpop.f32.mrb[0].mxu0
    %v772 = vadd.f32 0.0, %v771
    %v773 = vpop.f32.mrb[0].mxu0
    %v774 = vadd.f32 0.0, %v773
    %775 = vdwg.mxu0
    %v776 = vld [vmem:[%s2] sm:$0x3f]
    %v777 = vld [vmem:[%s2 + $0x8] sm:$0x3f]
    %v778 = vmul.f32 %v389, %v389
    %v779 = vmul.f32 %v391, %v391
    %v780 = vmul.f32 %v616, %v616
    %v781 = vmul.f32 %v618, %v618
    %v782 = vmul.f32 %v395, %v395
    %v783 = vmul.f32 %v397, %v397
    %v784 = vmul.f32 %v622, %v622
    %v785 = vmul.f32 %v624, %v624
    %v786 = vmul.f32 %v401, %v401
    %v787 = vmul.f32 %v403, %v403
    %v788 = vmul.f32 %v628, %v628
    %v789 = vmul.f32 %v630, %v630
    %v790 = vmul.f32 %v407, %v407
    %v791 = vmul.f32 %v409, %v409
    %v792 = vmul.f32 %v634, %v634
    %v793 = vmul.f32 %v636, %v636
    %v794 = vmul.f32 %v413, %v413
    %v795 = vmul.f32 %v415, %v415
    %v796 = vmul.f32 %v640, %v640
    %v797 = vmul.f32 %v642, %v642
    %v798 = vmul.f32 %v419, %v419
    %v799 = vmul.f32 %v421, %v421
    %v800 = vmul.f32 %v646, %v646
    %v801 = vmul.f32 %v648, %v648
    %v802 = vmul.f32 %v425, %v425
    %v803 = vmul.f32 %v427, %v427
    %v804 = vmul.f32 %v652, %v652
    %v805 = vmul.f32 %v654, %v654
    %v806 = vmul.f32 %v431, %v431
    %v807 = vmul.f32 %v433, %v433
    %v808 = vmul.f32 %v658, %v658
    %v809 = vmul.f32 %v660, %v660
    %v810 = vmul.f32 %v437, %v437
    %v811 = vmul.f32 %v439, %v439
    %v812 = vmul.f32 %v664, %v664
    %v813 = vmul.f32 %v666, %v666
    %v814 = vmul.f32 %v443, %v443
    %v815 = vmul.f32 %v445, %v445
    %v816 = vmul.f32 %v670, %v670
    %v817 = vmul.f32 %v672, %v672
    %v818 = vmul.f32 %v449, %v449
    %v819 = vmul.f32 %v451, %v451
    %v820 = vmul.f32 %v676, %v676
    %v821 = vmul.f32 %v678, %v678
    %v822 = vmul.f32 %v455, %v455
    %v823 = vmul.f32 %v457, %v457
    %v824 = vmul.f32 %v682, %v682
    %v825 = vmul.f32 %v684, %v684
    %v826 = vmul.f32 %v461, %v461
    %v827 = vmul.f32 %v463, %v463
    %v828 = vmul.f32 %v688, %v688
    %v829 = vmul.f32 %v690, %v690
    %v830 = vmul.f32 %v467, %v467
    %v831 = vmul.f32 %v469, %v469
    %v832 = vmul.f32 %v694, %v694
    %v833 = vmul.f32 %v696, %v696
    %v834 = vmul.f32 %v473, %v473
    %v835 = vmul.f32 %v475, %v475
    %v836 = vmul.f32 %v700, %v700
    %v837 = vmul.f32 %v702, %v702
    %v838 = vmul.f32 %v479, %v479
    %v839 = vmul.f32 %v481, %v481
    %v840 = vmul.f32 %v706, %v706
    %v841 = vmul.f32 %v708, %v708
    %v842 = vmul.f32 %v485, %v485
    %v843 = vmul.f32 %v487, %v487
    %v844 = vmul.f32 %v712, %v712
    %v845 = vmul.f32 %v714, %v714
    %v846 = vmul.f32 %v491, %v491
    %v847 = vmul.f32 %v493, %v493
    %v848 = vmul.f32 %v718, %v718
    %v849 = vmul.f32 %v720, %v720
    %v850 = vmul.f32 %v497, %v497
    %v851 = vmul.f32 %v499, %v499
    %v852 = vmul.f32 %v724, %v724
    %v853 = vmul.f32 %v726, %v726
    %v854 = vmul.f32 %v503, %v503
    %v855 = vmul.f32 %v505, %v505
    %v856 = vmul.f32 %v730, %v730
    %v857 = vmul.f32 %v732, %v732
    %v858 = vmul.f32 %v509, %v509
    %v859 = vmul.f32 %v511, %v511
    %v860 = vmul.f32 %v736, %v736
    %v861 = vmul.f32 %v738, %v738
    %v862 = vmul.f32 %v515, %v515
    %v863 = vmul.f32 %v517, %v517
    %v864 = vmul.f32 %v742, %v742
    %v865 = vmul.f32 %v744, %v744
    %v866 = vmul.f32 %v521, %v521
    %v867 = vmul.f32 %v523, %v523
    %v868 = vmul.f32 %v748, %v748
    %v869 = vmul.f32 %v750, %v750
    %v870 = vmul.f32 %v527, %v527
    %v871 = vmul.f32 %v529, %v529
    %v872 = vmul.f32 %v754, %v754
    %v873 = vmul.f32 %v756, %v756
    %v874 = vmul.f32 %v533, %v533
    %v875 = vmul.f32 %v535, %v535
    %v876 = vmul.f32 %v760, %v760
    %v877 = vmul.f32 %v762, %v762
    %v878 = vmul.f32 %v539, %v539
    %v879 = vmul.f32 %v541, %v541
    %v880 = vmul.f32 %v766, %v766
    %v881 = vmul.f32 %v768, %v768
    %v882 = vmul.f32 %v545, %v545
    %v883 = vmul.f32 %v547, %v547
    %v884 = vmul.f32 %v772, %v772
    %v885 = vmul.f32 %v774, %v774
    %vm886 = vcmask 719872
    %v888 = vsel %vm886, %v777, 0
    %890 = vmatprep.subr.mxu0 %v779
    %891 = vmatpush1.msra.mxu0 %v778
    %892 = vmatprep.subr.mxu0 %v783
    %893 = vmatpush1.msra.mxu0 %v782
    %894 = vmatprep.subr.mxu0 %v787
    %895 = vmatpush1.msra.mxu0 %v786
    %896 = vmatprep.subr.mxu0 %v791
    %897 = vmatpush1.msra.mxu0 %v790
    %898 = vmatprep.subr.mxu0 %v795
    %899 = vmatpush1.msra.mxu0 %v794
    %900 = vmatprep.subr.mxu0 %v799
    %901 = vmatpush1.msra.mxu0 %v798
    %902 = vmatprep.subr.mxu0 %v803
    %903 = vmatpush1.msra.mxu0 %v802
    %904 = vmatprep.subr.mxu0 %v807
    %905 = vmatpush1.msra.mxu0 %v806
    %906 = vmatprep.subr.mxu0 %v811
    %907 = vmatpush1.msra.mxu0 %v810
    %908 = vmatprep.subr.mxu0 %v815
    %909 = vmatpush1.msra.mxu0 %v814
    %910 = vmatprep.subr.mxu0 %v819
    %911 = vmatpush1.msra.mxu0 %v818
    %912 = vmatprep.subr.mxu0 %v823
    %913 = vmatpush1.msra.mxu0 %v822
    %914 = vmatprep.subr.mxu0 %v827
    %915 = vmatpush1.msra.mxu0 %v826
    %916 = vmatprep.subr.mxu0 %v831
    %917 = vmatpush1.msra.mxu0 %v830
    %918 = vmatprep.subr.mxu0 %v835
    %919 = vmatpush1.msra.mxu0 %v834
    %920 = vmatprep.subr.mxu0 %v839
    %921 = vmatpush1.msra.mxu0 %v838
    %922 = vmatprep.subr.mxu0 %v843
    %923 = vmatpush1.msra.mxu0 %v842
    %924 = vmatprep.subr.mxu0 %v847
    %925 = vmatpush1.msra.mxu0 %v846
    %926 = vmatprep.subr.mxu0 %v851
    %927 = vmatpush1.msra.mxu0 %v850
    %928 = vmatprep.subr.mxu0 %v855
    %929 = vmatpush1.msra.mxu0 %v854
    %930 = vmatprep.subr.mxu0 %v859
    %931 = vmatpush1.msra.mxu0 %v858
    %932 = vmatprep.subr.mxu0 %v863
    %933 = vmatpush1.msra.mxu0 %v862
    %934 = vmatprep.subr.mxu0 %v867
    %935 = vmatpush1.msra.mxu0 %v866
    %936 = vmatprep.subr.mxu0 %v871
    %937 = vmatpush1.msra.mxu0 %v870
    %938 = vmatprep.subr.mxu0 %v875
    %939 = vmatpush1.msra.mxu0 %v874
    %940 = vmatprep.subr.mxu0 %v879
    %941 = vmatpush1.msra.mxu0 %v878
    %942 = vmatprep.subr.mxu0 %v883
    %943 = vmatpush1.msra.mxu0 %v882
    %944 = vmatprep.subr.mxu0 0.0
    %945 = vmatpush1.msra.mxu0 0.0
    %946 = vmatprep.subr.mxu0 0.0
    %947 = vmatpush1.msra.mxu0 0.0
    %948 = vmatprep.subr.mxu0 0.0
    %949 = vmatpush1.msra.mxu0 0.0
    %950 = vmatprep.subr.mxu0 0.0
    %951 = vmatpush1.msra.mxu0 0.0
    %952 = vmatprep.subr.mxu0 0.0
    %953 = vmatpush1.msra.mxu0 0.0
    %954 = vmatprep.mubr.f32.mxu0 %v888
    %955 = vmatmul.mubr.f32.gmra.mrb[0].mxu0 %v776
    %v956 = vpop.f32.mrb[0].mxu0
    %v957 = vadd.f32 0.0, %v956
    %v958 = vpop.f32.mrb[0].mxu0
    %v959 = vadd.f32 0.0, %v958
    %960 = vdwg.mxu0
    %961 = vmatprep.subr.mxu0 %v781
    %962 = vmatpush1.msra.mxu0 %v780
    %963 = vmatprep.subr.mxu0 %v785
    %964 = vmatpush1.msra.mxu0 %v784
    %965 = vmatprep.subr.mxu0 %v789
    %966 = vmatpush1.msra.mxu0 %v788
    %967 = vmatprep.subr.mxu0 %v793
    %968 = vmatpush1.msra.mxu0 %v792
    %969 = vmatprep.subr.mxu0 %v797
    %970 = vmatpush1.msra.mxu0 %v796
    %971 = vmatprep.subr.mxu0 %v801
    %972 = vmatpush1.msra.mxu0 %v800
    %973 = vmatprep.subr.mxu0 %v805
    %974 = vmatpush1.msra.mxu0 %v804
    %975 = vmatprep.subr.mxu0 %v809
    %976 = vmatpush1.msra.mxu0 %v808
    %977 = vmatprep.subr.mxu0 %v813
    %978 = vmatpush1.msra.mxu0 %v812
    %979 = vmatprep.subr.mxu0 %v817
    %980 = vmatpush1.msra.mxu0 %v816
    %981 = vmatprep.subr.mxu0 %v821
    %982 = vmatpush1.msra.mxu0 %v820
    %983 = vmatprep.subr.mxu0 %v825
    %984 = vmatpush1.msra.mxu0 %v824
    %985 = vmatprep.subr.mxu0 %v829
    %986 = vmatpush1.msra.mxu0 %v828
    %987 = vmatprep.subr.mxu0 %v833
    %988 = vmatpush1.msra.mxu0 %v832
    %989 = vmatprep.subr.mxu0 %v837
    %990 = vmatpush1.msra.mxu0 %v836
    %991 = vmatprep.subr.mxu0 %v841
    %992 = vmatpush1.msra.mxu0 %v840
    %993 = vmatprep.subr.mxu0 %v845
    %994 = vmatpush1.msra.mxu0 %v844
    %995 = vmatprep.subr.mxu0 %v849
    %996 = vmatpush1.msra.mxu0 %v848
    %997 = vmatprep.subr.mxu0 %v853
    %998 = vmatpush1.msra.mxu0 %v852
    %999 = vmatprep.subr.mxu0 %v857
    %1000 = vmatpush1.msra.mxu0 %v856
    %1001 = vmatprep.subr.mxu0 %v861
    %1002 = vmatpush1.msra.mxu0 %v860
    %1003 = vmatprep.subr.mxu0 %v865
    %1004 = vmatpush1.msra.mxu0 %v864
    %1005 = vmatprep.subr.mxu0 %v869
    %1006 = vmatpush1.msra.mxu0 %v868
    %1007 = vmatprep.subr.mxu0 %v873
    %1008 = vmatpush1.msra.mxu0 %v872
    %1009 = vmatprep.subr.mxu0 %v877
    %1010 = vmatpush1.msra.mxu0 %v876
    %1011 = vmatprep.subr.mxu0 %v881
    %1012 = vmatpush1.msra.mxu0 %v880
    %1013 = vmatprep.subr.mxu0 %v885
    %1014 = vmatpush1.msra.mxu0 %v884
    %1015 = vmatprep.subr.mxu0 0.0
    %1016 = vmatpush1.msra.mxu0 0.0
    %1017 = vmatprep.subr.mxu0 0.0
    %1018 = vmatpush1.msra.mxu0 0.0
    %1019 = vmatprep.subr.mxu0 0.0
    %1020 = vmatpush1.msra.mxu0 0.0
    %1021 = vmatprep.subr.mxu0 0.0
    %1022 = vmatpush1.msra.mxu0 0.0
    %1023 = vmatprep.subr.mxu0 0.0
    %1024 = vmatpush1.msra.mxu0 0.0
    %1025 = vmatprep.mubr.f32.mxu0 %v888
    %1026 = vmatmul.mubr.f32.gmra.mrb[0].mxu0 %v776
    %v1027 = vpop.f32.mrb[0].mxu0
    %v1028 = vadd.f32 0.0, %v1027
    %v1029 = vpop.f32.mrb[0].mxu0
    %v1030 = vadd.f32 0.0, %v1029
    %1031 = vdwg.mxu0
    %v1032 = vsub.f32 0.0, %v957
    %v1033 = vsub.f32 0.0, %v959
    %v1034 = vsub.f32 0.0, %v1028
    %v1035 = vsub.f32 0.0, %v1030
    %v1036 = vmul.f32 %v1032, 1.442695
    %v1037 = vpow.pop %v1036
    %v1038 = vmul.f32 %v1033, 1.442695
    %v1039 = vpow.pop %v1038
    %v1040 = vmul.f32 %v1034, 1.442695
    %v1041 = vpow.pop %v1040
    %v1042 = vmul.f32 %v1035, 1.442695
    %v1043 = vpow.pop %v1042
    %v1044 = vmul.f32 %v1037, 1.5819767
    %v1045 = vmul.f32 %v1039, 1.5819767
    %v1046 = vmul.f32 %v1041, 1.5819767
    %v1047 = vmul.f32 %v1043, 1.5819767
    %v1048 = vadd.f32 %v1044, -1.0819767
    %v1049 = vadd.f32 %v1045, -1.0819767
    %v1050 = vadd.f32 %v1046, -1.0819767
    %v1051 = vadd.f32 %v1047, -1.0819767
    %1052 = vst [vmem:[#allocation2] sm:$0x3f] %v1048
    %1053 = vst [vmem:[#allocation2 + $0x8] sm:$0x3f] %v1049
    %1054 = vst [vmem:[#allocation2 + $0x10] sm:$0x3f] %v1050
    %1055 = vst [vmem:[#allocation2 + $0x18] sm:$0x3f] %v1051
    // Predicated region
    $region14: #{tpu_custom_call.1} parent=1 // pred_check
      _
    $region15: #{tpu_custom_call.1} parent=1 // pred_check_branch
      %1057 = sbr.rel (0) target = $region17
    $region16: #{tpu_custom_call.1} parent=1 // pred_region
      %s1059 = ssub.s32 512, 512
      %1060 = vsyncadd [#allocation3], %s1059
      %s1062 = sshll.u32 [#allocation2], 4
      %s1063 = int_to_ptr.vmem [resolvable:$true] %s1062
      %1065 = dma.vmem_to_hbm [thread:$0]  %s1063, 512, %s3, [#allocation3]
    $region17: #{tpu_custom_call.1} parent=1 // pred_fallthru
      _
    // Predicated region
    $region18: #{tpu_custom_call.1} parent=1 // pred_check
      _
    $region19: #{tpu_custom_call.1} parent=1 // pred_check_branch
      %1067 = sbr.rel (0) target = $region21
    $region20: #{tpu_custom_call.1} parent=1 // pred_region
      %1068 = dma.done [#allocation3], 512
    $region21: #{tpu_custom_call.1} parent=1 // pred_fallthru
      _
    %1069 = vsyncpa [#allocation3], 1

</llo_original>
